<compile_context>
chip_gen: v5e
topology: v5e:2x2
jax: 0.10.0
libtpu: 0.0.40
codegen_flags: <defaults>
</compile_context>

<pallas_src>
import jax
import jax.numpy as jnp
from jax import lax
from jax.experimental import pallas as pl
from jax.experimental.pallas import tpu as pltpu


def _cln_kernel(eps, inv_h, affine_dtype):
    """LayerNorm + per-batch affine. Blocks: x (tb, ts, Hp), scale/shift (tb, 1, Hp)."""

    def kernel(x_ref, scale_ref, shift_ref, o_ref):
        x = x_ref[...].astype(jnp.float32)                      # (tb, ts, Hp)
        # One-pass statistics.  Sums run over the zero-padded lane axis and are
        # divided by the TRUE hidden size, so padding does not bias them.
        u = jnp.sum(x, axis=-1, keepdims=True) * inv_h          # (tb, ts, 1)
        ex2 = jnp.sum(x * x, axis=-1, keepdims=True) * inv_h    # (tb, ts, 1)
        var = jnp.maximum(ex2 - u * u, 0.0)                     # clamp f32 cancellation
        inv = lax.rsqrt(var + eps)                              # EUP slot, not VPU divide
        xn = ((x - u) * inv).astype(affine_dtype)               # (tb, ts, Hp)
        scale = scale_ref[...].astype(affine_dtype)             # (tb, 1, Hp)
        shift = shift_ref[...].astype(affine_dtype)             # (tb, 1, Hp)
        o_ref[...] = (scale * xn + shift).astype(o_ref.dtype)

    return kernel


def _tpu_memory_params():
    """Generation-aware (per-buffer tile target bytes, VMEM limit cap)."""
    try:
        vmem = int(pltpu.get_tpu_info().vmem_capacity_bytes)
    except Exception:
        vmem = 64 << 20
    if vmem <= (64 << 20):
        # v7x class: 64 MiB VMEM per TC -> smaller tiles, cap with headroom.
        target_bytes = 2 << 20
    else:
        # v5e / v6e: 128 MiB VMEM -> bigger tiles amortize per-step overhead.
        target_bytes = 4 << 20
    vmem_cap = (vmem * 3) // 4
    return target_bytes, vmem_cap


def _pick_blocks(B, S, Hp, itemsize, target_bytes):
    """Pick (tb, ts): keep each grid step's DMA near target_bytes, sublane-aligned."""
    sub = 16 if itemsize <= 2 else 8
    slab = S * Hp * itemsize                     # bytes for one batch's (S, Hp) slab
    if slab >= target_bytes or B == 1:
        tb = 1
        rows = target_bytes // max(1, Hp * itemsize)
        rows = max(sub, (rows // sub) * sub)
        ts = S if rows >= S else int(rows)
    else:
        ts = S
        tb = max(1, min(B, target_bytes // max(1, slab)))
        # Keep at least 2 grid steps so v7x's second TensorCore gets work.
        tb = max(1, min(tb, pl.cdiv(B, 2)))
    return int(tb), int(ts)


def conditional_layer_norm(x, cond, weight, bias, w_beta, w_gamma,
                           eps=1e-12, block_s=None, block_b=None):
    """x: [B, S, H]; cond: [B, 2H]; weight/bias: [H]; w_beta/w_gamma: [H, 2H]."""
    B, S, H = x.shape
    assert cond.shape == (B, 2 * H)
    f32 = jnp.float32

    # ---- hoisted conditioning path: two small GEMMs, weight/bias folded in.
    dn = (((1,), (1,)), ((), ()))                          # cond @ W^T
    gamma = lax.dot_general(cond.astype(f32), w_gamma.astype(f32), dn)   # (B, H)
    beta = lax.dot_general(cond.astype(f32), w_beta.astype(f32), dn)     # (B, H)
    scale = weight.astype(f32)[None, :] + gamma                          # (B, H)
    shift = bias.astype(f32)[None, :] + beta                             # (B, H)

    # ---- lane-dense hidden axis: pad H to a multiple of 128, zero fill.
    Hp = max(128, ((H + 127) // 128) * 128)
    if Hp != H:
        x_k = jnp.pad(x, ((0, 0), (0, 0), (0, Hp - H)))
        scale = jnp.pad(scale, ((0, 0), (0, Hp - H)))
        shift = jnp.pad(shift, ((0, 0), (0, Hp - H)))
    else:
        x_k = x
    scale = scale.reshape(B, 1, Hp)
    shift = shift.reshape(B, 1, Hp)

    itemsize = jnp.dtype(x.dtype).itemsize
    target_bytes, vmem_cap = _tpu_memory_params()
    tb, ts = _pick_blocks(B, S, Hp, itemsize, target_bytes)
    if block_s is not None:
        ts, tb = int(block_s), 1
    if block_b is not None:
        tb = int(block_b)
    grid = (pl.cdiv(B, tb), pl.cdiv(S, ts))

    # ---- VMEM budget: double-buffered in/out tiles + scale/shift blocks + the
    # ~4 full-tile f32 intermediates the body materializes.
    blk = tb * ts * Hp
    tile_io = blk * itemsize
    interm = 4 * blk * 4
    needed = 4 * tile_io + 4 * tb * Hp * 4 + interm + (1 << 20)
    vmem_limit = int(min(max(needed, 16 << 20), vmem_cap))

    # bf16-native final affine on bf16 inputs (stats stay f32); full f32 otherwise.
    affine_dtype = x.dtype if itemsize <= 2 else jnp.float32
    inv_h = 1.0 / float(H)

    cost = pl.CostEstimate(
        flops=8 * B * S * Hp,
        transcendentals=B * S,
        bytes_accessed=2 * B * S * Hp * itemsize + 2 * B * Hp * 4,
    )

    out = pl.pallas_call(
        _cln_kernel(eps, inv_h, affine_dtype),
        out_shape=jax.ShapeDtypeStruct((B, S, Hp), x.dtype),
        grid_spec=pltpu.PrefetchScalarGridSpec(
            num_scalar_prefetch=0,
            grid=grid,
            in_specs=[
                pl.BlockSpec((tb, ts, Hp), lambda bi, si: (bi, si, 0)),  # x
                pl.BlockSpec((tb, 1, Hp), lambda bi, si: (bi, 0, 0)),    # scale
                pl.BlockSpec((tb, 1, Hp), lambda bi, si: (bi, 0, 0)),    # shift
            ],
            out_specs=pl.BlockSpec((tb, ts, Hp), lambda bi, si: (bi, si, 0)),
        ),
        compiler_params=pltpu.CompilerParams(
            dimension_semantics=("parallel", "parallel"),
            vmem_limit_bytes=vmem_limit,
        ),
        cost_estimate=cost,
    )(x_k, scale, shift)

    if Hp != H:
        out = out[:, :, :H]
    return out


def conditional_layer_norm_ref(x, cond, weight, bias, w_beta, w_gamma, eps=1e-12):
    """Pure-JAX reference mirroring the PyTorch forward."""
    cond = cond[:, None, :]                      # [B, 1, 2H]
    beta = cond @ w_beta.T                       # [B, 1, H]
    gamma = cond @ w_gamma.T                     # [B, 1, H]
    b = bias + beta
    w = weight + gamma
    u = x.mean(-1, keepdims=True)
    s = ((x - u) ** 2).mean(-1, keepdims=True)
    xn = (x - u) / jnp.sqrt(s + eps)
    return w * xn + b


if __name__ == "__main__":
    eps = 1e-12
    key = jax.random.PRNGKey(0)

    def run_case(B, S, H, key, dtype=jnp.float32, block_s=None, atol=1e-4, rtol=1e-4):
        kx, kc, kwb, kwg = jax.random.split(key, 4)
        x = jax.random.normal(kx, (B, S, H), dtype=jnp.float32).astype(dtype)
        cond = jax.random.normal(kc, (B, 2 * H), dtype=jnp.float32).astype(dtype)
        # Module params (shapes from __init__): weight=ones(H), bias=zeros(H),
        # Linear(2H->H, bias=False) weights of torch shape [H, 2H] (random so
        # the conditional path is exercised).
        weight = jnp.ones((H,), dtype=dtype)
        bias = jnp.zeros((H,), dtype=dtype)
        w_beta = (0.02 * jax.random.normal(kwb, (H, 2 * H), dtype=jnp.float32)).astype(dtype)
        w_gamma = (0.02 * jax.random.normal(kwg, (H, 2 * H), dtype=jnp.float32)).astype(dtype)

        out = conditional_layer_norm(x, cond, weight, bias, w_beta, w_gamma,
                                     eps, block_s=block_s)
        out = jax.block_until_ready(out)
        ref = conditional_layer_norm_ref(
            x.astype(jnp.float32), cond.astype(jnp.float32),
            weight.astype(jnp.float32), bias.astype(jnp.float32),
            w_beta.astype(jnp.float32), w_gamma.astype(jnp.float32), eps)
        assert out.shape == (B, S, H)
        assert jnp.allclose(out.astype(jnp.float32), ref, atol=atol, rtol=rtol), \
            "mismatch vs reference"

    k1, k2, k3 = jax.random.split(key, 3)
    # Padded-H path (H=32 -> Hp=128) with batch tiling.
    run_case(B=2, S=8, H=32, key=k1)
    # (batch, seq-tile) grid path with an explicit seq block.
    run_case(B=2, S=24, H=128, key=k2, block_s=8)
    # bf16 input: f32 stats, bf16 final affine.
    run_case(B=2, S=16, H=128, key=k3, dtype=jnp.bfloat16, atol=5e-2, rtol=5e-2)

    print("KERNEL_OK")
</pallas_src>

<mosaic_0001>
module attributes {stable_mosaic.version = 11 : i64} {
  func.func @kernel(%arg0: i32, %arg1: i32, %arg2: memref<1x8x128xf32, #tpu.memory_space<vmem>>, %arg3: memref<1x1x128xf32, #tpu.memory_space<vmem>>, %arg4: memref<1x1x128xf32, #tpu.memory_space<vmem>>, %arg5: memref<1x8x128xf32, #tpu.memory_space<vmem>>) attributes {dimension_semantics = [#tpu.dimension_semantics<parallel>, #tpu.dimension_semantics<parallel>], iteration_bounds = array<i64: 2, 1>, scalar_prefetch = 0 : i64, scratch_operands = 0 : i64, tpu.core_type = #tpu.core_type<tc>, window_params = [{transform_indices = @transform_0, window_bounds = array<i64: 1, 8, 128>}, {transform_indices = @transform_1, window_bounds = array<i64: 1, 1, 128>}, {transform_indices = @transform_2, window_bounds = array<i64: 1, 1, 128>}, {transform_indices = @transform_3, window_bounds = array<i64: 1, 8, 128>}]} {
    %c0 = arith.constant 0 : index
    %c0_0 = arith.constant 0 : index
    %c0_1 = arith.constant 0 : index
    %0 = vector.load %arg2[%c0, %c0_0, %c0_1] : memref<1x8x128xf32, #tpu.memory_space<vmem>>, vector<1x8x128xf32>
    %cst = arith.constant dense<0.000000e+00> : vector<1x8xf32>
    %1 = vector.multi_reduction <add>, %0, %cst [2] : vector<1x8x128xf32> to vector<1x8xf32>
    %2 = vector.shape_cast %1 : vector<1x8xf32> to vector<1x8x1xf32>
    %cst_2 = arith.constant 3.125000e-02 : f32
    %3 = vector.broadcast %cst_2 : f32 to vector<1x8x1xf32>
    %4 = arith.mulf %2, %3 : vector<1x8x1xf32>
    %5 = arith.mulf %0, %0 : vector<1x8x128xf32>
    %cst_3 = arith.constant dense<0.000000e+00> : vector<1x8xf32>
    %6 = vector.multi_reduction <add>, %5, %cst_3 [2] : vector<1x8x128xf32> to vector<1x8xf32>
    %7 = vector.shape_cast %6 : vector<1x8xf32> to vector<1x8x1xf32>
    %cst_4 = arith.constant 3.125000e-02 : f32
    %8 = vector.broadcast %cst_4 : f32 to vector<1x8x1xf32>
    %9 = arith.mulf %7, %8 : vector<1x8x1xf32>
    %10 = arith.mulf %4, %4 : vector<1x8x1xf32>
    %11 = arith.subf %9, %10 : vector<1x8x1xf32>
    %cst_5 = arith.constant 0.000000e+00 : f32
    %12 = vector.broadcast %cst_5 : f32 to vector<1x8x1xf32>
    %13 = arith.maximumf %11, %12 : vector<1x8x1xf32>
    %cst_6 = arith.constant 9.99999996E-13 : f32
    %14 = vector.broadcast %cst_6 : f32 to vector<1x8x1xf32>
    %15 = arith.addf %13, %14 : vector<1x8x1xf32>
    %16 = math.rsqrt %15 : vector<1x8x1xf32>
    %17 = vector.broadcast %4 : vector<1x8x1xf32> to vector<1x8x128xf32>
    %18 = arith.subf %0, %17 : vector<1x8x128xf32>
    %19 = vector.broadcast %16 : vector<1x8x1xf32> to vector<1x8x128xf32>
    %20 = arith.mulf %18, %19 : vector<1x8x128xf32>
    %c0_7 = arith.constant 0 : index
    %c0_8 = arith.constant 0 : index
    %c0_9 = arith.constant 0 : index
    %21 = vector.load %arg3[%c0_7, %c0_8, %c0_9] : memref<1x1x128xf32, #tpu.memory_space<vmem>>, vector<1x1x128xf32>
    %c0_10 = arith.constant 0 : index
    %c0_11 = arith.constant 0 : index
    %c0_12 = arith.constant 0 : index
    %22 = vector.load %arg4[%c0_10, %c0_11, %c0_12] : memref<1x1x128xf32, #tpu.memory_space<vmem>>, vector<1x1x128xf32>
    %23 = vector.broadcast %21 : vector<1x1x128xf32> to vector<1x8x128xf32>
    %24 = arith.mulf %23, %20 : vector<1x8x128xf32>
    %25 = vector.broadcast %22 : vector<1x1x128xf32> to vector<1x8x128xf32>
    %26 = arith.addf %24, %25 : vector<1x8x128xf32>
    %c0_13 = arith.constant 0 : index
    %c0_14 = arith.constant 0 : index
    %c0_15 = arith.constant 0 : index
    %27 = vector.load %arg5[%c0_13, %c0_14, %c0_15] : memref<1x8x128xf32, #tpu.memory_space<vmem>>, vector<1x8x128xf32>
    tpu.vector_store %arg5[%c0_13, %c0_14, %c0_15], %26 {strides = array<i32>} : memref<1x8x128xf32, #tpu.memory_space<vmem>>, vector<1x8x128xf32>,
    return
  }
  func.func @transform_0(%arg0: i32, %arg1: i32) -> (i32, i32, i32) {
    %c0_i32 = arith.constant 0 : i32
    %c0_i32_0 = arith.constant 0 : i32
    return %arg0, %arg1, %c0_i32 : i32, i32, i32
  }
  func.func @transform_1(%arg0: i32, %arg1: i32) -> (i32, i32, i32) {
    %c0_i32 = arith.constant 0 : i32
    %c0_i32_0 = arith.constant 0 : i32
    %c0_i32_1 = arith.constant 0 : i32
    return %arg0, %c0_i32, %c0_i32_0 : i32, i32, i32
  }
  func.func @transform_2(%arg0: i32, %arg1: i32) -> (i32, i32, i32) {
    %c0_i32 = arith.constant 0 : i32
    %c0_i32_0 = arith.constant 0 : i32
    %c0_i32_1 = arith.constant 0 : i32
    return %arg0, %c0_i32, %c0_i32_0 : i32, i32, i32
  }
  func.func @transform_3(%arg0: i32, %arg1: i32) -> (i32, i32, i32) {
    %c0_i32 = arith.constant 0 : i32
    %c0_i32_0 = arith.constant 0 : i32
    return %arg0, %arg1, %c0_i32 : i32, i32, i32
  }
}

</mosaic_0001>

<llo_original>
// kernel: tpu_custom_call.1
$region0: #{tpu_custom_call.1}
  #allocation0 [shape = 'u32[]', space=smem, size = 0x4, offset = 0x4, fixed_abs, tag = 'smem constant byte address 0x4 - core index']
  #allocation1 [shape = 'u32[72,128]{1,0:T(1,128)}', space=vmem, size = 0x9000, scoped, tag = 'internal scratch']
  %s0 = inlined_call_operand.hbm [shape: f32[2,8,128], index: 0, kind: input, shape index: {}]
  %s1 = inlined_call_operand.hbm [shape: f32[2,1,128], index: 1, kind: input, shape index: {}]
  %s2 = inlined_call_operand.hbm [shape: f32[2,1,128], index: 2, kind: input, shape index: {}]
  %s3 = inlined_call_operand.hbm [shape: f32[2,8,128], index: 3, kind: output, shape index: {}]
  %s4 = sld [smem:[#allocation0]]
  $region57: #{tpu_custom_call.1} parent=0
    _
  %s6 = ssub.s32 1, %s4
  %s7 = scalar_select 0, %s6, %s4
  $region1: #{tpu_custom_call.1} parent=0
    #allocation2 [shape = 'u8[8192]{0}', space=vmem, size = 0x2000, scoped, tag = 'input window, operand 0']
    #allocation3 [shape = 's32[2]{0}', space=sflag, size = 0x8, scoped, tag = 'scoped memory for tpu_custom_call.1']
    #allocation4 [shape = 's32[2]{0}', space=sflag, size = 0x8, scoped, tag = 'scoped memory for tpu_custom_call.1']
    #allocation5 [shape = 'u8[1024]{0}', space=vmem, size = 0x400, scoped, tag = 'input window, operand 1']
    #allocation6 [shape = 's32[2]{0}', space=sflag, size = 0x8, scoped, tag = 'scoped memory for tpu_custom_call.1']
    #allocation7 [shape = 'u8[1024]{0}', space=vmem, size = 0x400, scoped, tag = 'input window, operand 2']
    #allocation8 [shape = 'u8[8192]{0}', space=vmem, size = 0x2000, scoped, tag = 'output window, operand 0']
    %8 = vsyncpa [#allocation3], 0
    %s9 = scalar_lea.sflag [#allocation3], 1
    %10 = vsyncpa %s9, 0
    %11 = vsyncpa [#allocation6], 0
    %s12 = scalar_lea.sflag [#allocation6], 1
    %13 = vsyncpa %s12, 0
    %14 = vsyncpa [#allocation4], 0
    %s15 = scalar_lea.sflag [#allocation4], 1
    %16 = vsyncpa %s15, 0
    loop: start=0, step=1, limit=4
    $region2: #{tpu_custom_call.1} parent=1 // loop_pre_header
      _
    $region3: #{tpu_custom_call.1} parent=1 // loop_header
      %s18 = sphi 0, %s22
      %p19 = scmp.ge.s32.totalorder %s18, 4
      %s25 = sphi 0, %s37
      %s26 = sphi 0, %s33
      %s27 = sphi 0, %s25
      %s28 = sphi 0, %s26
      %s29 = sphi 0, %s27
      %s30 = sphi 0, %s28
      %s42 = sphi 0, %s44
      %s45 = sphi 0, %s42
      %s46 = sphi 0, %s45
      %s62 = sphi 0, %s46
      %s68 = sphi 0, %s70
      %s71 = sphi 0, %s68
      %s72 = sphi 0, %s71
      %s88 = sphi 0, %s72
      %s94 = sphi 0, %s96
      %s97 = sphi 0, %s94
      %s98 = sphi 0, %s97
      %s114 = sphi 0, %s98
      %s122 = sphi 0, %s124
      %s125 = sphi 0, %s122
      %s126 = sphi 0, %s125
      %s142 = sphi 0, %s126
    $region4: #{tpu_custom_call.1} parent=1 // loop_header_branch
      %21 = sbr.rel (%p19) target = $region8
    $region5: #{tpu_custom_call.1} parent=1 // loop_body
      %s23 = ssub.s32 %s18, 1
      %s24 = ssub.s32 %s18, 2
      %s31 = sadd.s32 1, %s26
      %p32 = scmp.ge.s32.totalorder %s31, 1
      %s33 = scalar_select %p32, 0, %s31
      %s34 = sadd.s32 1, %s25
      %s35 = scalar_select %p32, %s34, %s25
      %p36 = scmp.ge.s32.totalorder %s35, 2
      %s37 = scalar_select %p36, 0, %s35
      %s38 = ssub.s32 %s25, %s37
      %s39 = ssub.s32 %s26, %s33
      %s40 = sor.u32 %s38, %s39
      %p41 = scmp.eq.s32.totalorder %s40, 0
      %s43 = sadd.s32 %s42, 1
      %s44 = scalar_select %p41, %s42, %s43
      %p47 = pneg %p41
      %p48 = scmp.eq.s32.totalorder %s18, 1
      %p49 = por %p47, %p48
      %p50 = scmp.ne.s32.totalorder %s42, %s45
      %p51 = scmp.eq.s32.totalorder %s18, 0
      %p52 = por %p50, %p51
      %p53 = scmp.ne.s32.totalorder %s42, %s45
      %p54 = scmp.eq.s32.totalorder %s23, 1
      %p55 = por %p53, %p54
      %p56 = scmp.ne.s32.totalorder %s45, %s46
      %p57 = scmp.eq.s32.totalorder %s23, 0
      %p58 = por %p56, %p57
      %p59 = scmp.ne.s32.totalorder %s45, %s46
      %p60 = scmp.eq.s32.totalorder %s24, 1
      %p61 = por %p59, %p60
      %p63 = scmp.ne.s32.totalorder %s46, %s62
      %p64 = scmp.eq.s32.totalorder %s24, 0
      %p65 = por %p63, %p64
      %s66 = ssub.s32 %s25, %s37
      %p67 = scmp.eq.s32.totalorder %s66, 0
      %s69 = sadd.s32 %s68, 1
      %s70 = scalar_select %p67, %s68, %s69
      %p73 = pneg %p67
      %p74 = scmp.eq.s32.totalorder %s18, 1
      %p75 = por %p73, %p74
      %p76 = scmp.ne.s32.totalorder %s68, %s71
      %p77 = scmp.eq.s32.totalorder %s18, 0
      %p78 = por %p76, %p77
      %p79 = scmp.ne.s32.totalorder %s68, %s71
      %p80 = scmp.eq.s32.totalorder %s23, 1
      %p81 = por %p79, %p80
      %p82 = scmp.ne.s32.totalorder %s71, %s72
      %p83 = scmp.eq.s32.totalorder %s23, 0
      %p84 = por %p82, %p83
      %p85 = scmp.ne.s32.totalorder %s71, %s72
      %p86 = scmp.eq.s32.totalorder %s24, 1
      %p87 = por %p85, %p86
      %p89 = scmp.ne.s32.totalorder %s72, %s88
      %p90 = scmp.eq.s32.totalorder %s24, 0
      %p91 = por %p89, %p90
      %s92 = ssub.s32 %s25, %s37
      %p93 = scmp.eq.s32.totalorder %s92, 0
      %s95 = sadd.s32 %s94, 1
      %s96 = scalar_select %p93, %s94, %s95
      %p99 = pneg %p93
      %p100 = scmp.eq.s32.totalorder %s18, 1
      %p101 = por %p99, %p100
      %p102 = scmp.ne.s32.totalorder %s94, %s97
      %p103 = scmp.eq.s32.totalorder %s18, 0
      %p104 = por %p102, %p103
      %p105 = scmp.ne.s32.totalorder %s94, %s97
      %p106 = scmp.eq.s32.totalorder %s23, 1
      %p107 = por %p105, %p106
      %p108 = scmp.ne.s32.totalorder %s97, %s98
      %p109 = scmp.eq.s32.totalorder %s23, 0
      %p110 = por %p108, %p109
      %p111 = scmp.ne.s32.totalorder %s97, %s98
      %p112 = scmp.eq.s32.totalorder %s24, 1
      %p113 = por %p111, %p112
      %p115 = scmp.ne.s32.totalorder %s98, %s114
      %p116 = scmp.eq.s32.totalorder %s24, 0
      %p117 = por %p115, %p116
      %s118 = ssub.s32 %s25, %s37
      %s119 = ssub.s32 %s26, %s33
      %s120 = sor.u32 %s118, %s119
      %p121 = scmp.eq.s32.totalorder %s120, 0
      %s123 = sadd.s32 %s122, 1
      %s124 = scalar_select %p121, %s122, %s123
      %p127 = pneg %p121
      %p128 = scmp.eq.s32.totalorder %s18, 1
      %p129 = por %p127, %p128
      %p130 = scmp.ne.s32.totalorder %s122, %s125
      %p131 = scmp.eq.s32.totalorder %s18, 0
      %p132 = por %p130, %p131
      %p133 = scmp.ne.s32.totalorder %s122, %s125
      %p134 = scmp.eq.s32.totalorder %s23, 1
      %p135 = por %p133, %p134
      %p136 = scmp.ne.s32.totalorder %s125, %s126
      %p137 = scmp.eq.s32.totalorder %s23, 0
      %p138 = por %p136, %p137
      %p139 = scmp.ne.s32.totalorder %s125, %s126
      %p140 = scmp.eq.s32.totalorder %s24, 1
      %p141 = por %p139, %p140
      %p143 = scmp.ne.s32.totalorder %s126, %s142
      %p144 = scmp.eq.s32.totalorder %s24, 0
      %p145 = por %p143, %p144
      %p146 = scmp.le.s32.totalorder 1, %s18
      %p147 = scmp.lt.s32.totalorder %s18, 3
      %p148 = pnand %p146, %p147
      %p149 = pneg %p148
      // Predicated region
      $region9: #{tpu_custom_call.1} parent=5 // pred_check
        _
      $region10: #{tpu_custom_call.1} parent=5 // pred_check_branch
        %151 = sbr.rel (%p148) target = $region12
      $region11: #{tpu_custom_call.1} parent=5 // pred_region
        %s152 = ssub.s32 %s18, 1
      $region12: #{tpu_custom_call.1} parent=5 // pred_fallthru
        _
      %p153 = scmp.lt.s32.totalorder %s18, 2
      // Predicated region
      $region13: #{tpu_custom_call.1} parent=5 // pred_check
        %p154 = pneg %p153
      $region14: #{tpu_custom_call.1} parent=5 // pred_check_branch
        %156 = sbr.rel (%p154) target = $region16
      $region15: #{tpu_custom_call.1} parent=5 // pred_region
        // Predicated region
        $region17: #{tpu_custom_call.1} parent=15 // pred_check
          %p157 = pneg %p52
        $region18: #{tpu_custom_call.1} parent=15 // pred_check_branch
          %159 = sbr.rel (%p157) target = $region20
        $region19: #{tpu_custom_call.1} parent=15 // pred_region
          %s160 = sand.u32 %s42, 1
          %s161 = scalar_lea.sflag [#allocation3], %s160
          %s162 = sand.u32 %s42, 1
          %s163 = smul.addr %s162, 8
          %s164 = scalar_lea.vmem [#allocation2], %s163
          %166 = vsyncadd %s161, 0
          %s167 = sadd.s32 %s26, %s25
          %s168 = smul.addr %s167, 8
          %s169 = scalar_lea.hbm %s0, %s168
          %s171 = sshll.u32 %s169, 4
          %s172 = int_to_ptr.hbm [resolvable:$true] %s171
          %s173 = sshll.u32 %s164, 4
          %s174 = int_to_ptr.vmem [resolvable:$true] %s173
          %176 = dma.hbm_to_vmem [thread:$0]  %s172, 128, %s174, %s161
        $region20: #{tpu_custom_call.1} parent=15 // pred_fallthru
          _
        // Predicated region
        $region21: #{tpu_custom_call.1} parent=15 // pred_check
          %p177 = pneg %p78
        $region22: #{tpu_custom_call.1} parent=15 // pred_check_branch
          %179 = sbr.rel (%p177) target = $region24
        $region23: #{tpu_custom_call.1} parent=15 // pred_region
          %s180 = sand.u32 %s18, 1
          %s181 = scalar_lea.sflag [#allocation6], %s180
          %s182 = sand.u32 %s68, 1
          %s183 = scalar_lea.vmem [#allocation5], %s182
          %185 = vsyncadd %s181, 0
          %s186 = scalar_lea.hbm %s1, %s25
          %s188 = sshll.u32 %s186, 4
          %s189 = int_to_ptr.hbm [resolvable:$true] %s188
          %s190 = sshll.u32 %s183, 4
          %s191 = int_to_ptr.vmem [resolvable:$true] %s190
          %193 = dma.hbm_to_vmem [thread:$0]  %s189, 16, %s191, %s181
        $region24: #{tpu_custom_call.1} parent=15 // pred_fallthru
          _
        // Predicated region
        $region25: #{tpu_custom_call.1} parent=15 // pred_check
          %p194 = pneg %p104
        $region26: #{tpu_custom_call.1} parent=15 // pred_check_branch
          %196 = sbr.rel (%p194) target = $region28
        $region27: #{tpu_custom_call.1} parent=15 // pred_region
          %s197 = sand.u32 %s18, 1
          %s198 = scalar_lea.sflag [#allocation6], %s197
          %s199 = sand.u32 %s94, 1
          %s200 = scalar_lea.vmem [#allocation7], %s199
          %202 = vsyncadd %s198, 0
          %s203 = scalar_lea.hbm %s2, %s25
          %s205 = sshll.u32 %s203, 4
          %s206 = int_to_ptr.hbm [resolvable:$true] %s205
          %s207 = sshll.u32 %s200, 4
          %s208 = int_to_ptr.vmem [resolvable:$true] %s207
          %210 = dma.hbm_to_vmem [thread:$0]  %s206, 16, %s208, %s198
        $region28: #{tpu_custom_call.1} parent=15 // pred_fallthru
          _
      $region16: #{tpu_custom_call.1} parent=5 // pred_fallthru
        _
      %p211 = scmp.le.s32.totalorder 1, %s18
      %p212 = scmp.lt.s32.totalorder %s18, 3
      %p213 = pnand %p211, %p212
      %p214 = pneg %p213
      // Predicated region
      $region29: #{tpu_custom_call.1} parent=5 // pred_check
        _
      $region30: #{tpu_custom_call.1} parent=5 // pred_check_branch
        %216 = sbr.rel (%p213) target = $region32
      $region31: #{tpu_custom_call.1} parent=5 // pred_region
        %s217 = ssub.s32 %s18, 1
        %s218 = sand.u32 %s45, 1
        %s219 = scalar_lea.sflag [#allocation3], %s218
        %s220 = sand.u32 %s45, 1
        %s221 = smul.addr %s220, 8
        %s222 = scalar_lea.vmem [#allocation2], %s221
        // Predicated region
        $region33: #{tpu_custom_call.1} parent=31 // pred_check
          %p223 = pneg %p58
        $region34: #{tpu_custom_call.1} parent=31 // pred_check_branch
          %225 = sbr.rel (%p223) target = $region36
        $region35: #{tpu_custom_call.1} parent=31 // pred_region
          %227 = dma.done %s219, 128
        $region36: #{tpu_custom_call.1} parent=31 // pred_fallthru
          _
        %s228 = sand.u32 %s23, 1
        %s229 = scalar_lea.sflag [#allocation6], %s228
        %s230 = sand.u32 %s71, 1
        %s231 = scalar_lea.vmem [#allocation5], %s230
        // Predicated region
        $region37: #{tpu_custom_call.1} parent=31 // pred_check
          %p232 = pneg %p84
        $region38: #{tpu_custom_call.1} parent=31 // pred_check_branch
          %234 = sbr.rel (%p232) target = $region40
        $region39: #{tpu_custom_call.1} parent=31 // pred_region
          %236 = dma.done %s229, 16
        $region40: #{tpu_custom_call.1} parent=31 // pred_fallthru
          _
        %s237 = sand.u32 %s23, 1
        %s238 = scalar_lea.sflag [#allocation6], %s237
        %s239 = sand.u32 %s97, 1
        %s240 = scalar_lea.vmem [#allocation7], %s239
        // Predicated region
        $region41: #{tpu_custom_call.1} parent=31 // pred_check
          %p241 = pneg %p110
        $region42: #{tpu_custom_call.1} parent=31 // pred_check_branch
          %243 = sbr.rel (%p241) target = $region44
        $region43: #{tpu_custom_call.1} parent=31 // pred_region
          %245 = dma.done %s238, 16
        $region44: #{tpu_custom_call.1} parent=31 // pred_fallthru
          _
        %s246 = sand.u32 %s45, 1
        %s247 = scalar_lea.sflag [#allocation3], %s246
        %s248 = sand.u32 %s45, 1
        %s249 = smul.addr %s248, 8
        %s250 = scalar_lea.vmem [#allocation2], %s249
        %p251 = pneg %p58
        %p252 = pneg %p55
        %s253 = sand.u32 %s23, 1
        %s254 = scalar_lea.sflag [#allocation6], %s253
        %s255 = sand.u32 %s71, 1
        %s256 = scalar_lea.vmem [#allocation5], %s255
        %p257 = pneg %p84
        %p258 = pneg %p81
        %s259 = sand.u32 %s23, 1
        %s260 = scalar_lea.sflag [#allocation6], %s259
        %s261 = sand.u32 %s97, 1
        %s262 = scalar_lea.vmem [#allocation7], %s261
        %p263 = pneg %p110
        %p264 = pneg %p107
        %p265 = pneg %p138
        %p266 = pneg %p135
        %s267 = sand.u32 %s125, 1
        %s268 = scalar_lea.sflag [#allocation4], %s267
        %s269 = sand.u32 %s125, 1
        %s270 = smul.addr %s269, 8
        %s271 = scalar_lea.vmem [#allocation8], %s270
        %v272 = vld [vmem:[%s222] sm:$0xff]
        %273 = vadd.xlane.f32.xlu0 %v272
        %v274 = vpop.xlane.xlu0 %273
        %v275 = vmul.f32 %v274, 0.03125
        %v276 = vmul.f32 %v272, %v272
        %277 = vadd.xlane.f32.xlu0 %v276
        %v278 = vpop.xlane.xlu0 %277
        %v279 = vmul.f32 %v278, 0.03125
        %v280 = vmul.f32 %v275, %v275
        %v281 = vsub.f32 %v279, %v280
        %v282 = vmax.f32 %v281, 0.0
        %v283 = vadd.f32 %v282, 1e-12
        %v284 = vrsqrt.pop %v283
        %v285 = vmul.f32 %v284, %v283
        %v286 = vmul.f32 %v285, %v284
        %v287 = vmul.f32 0.5, %v286
        %v288 = vsub.f32 1.5, %v287
        %v289 = vmul.f32 %v284, %v288
        %vm290 = vweird.f32 %v283
        %vm291 = vweird.f32 %v284
        %vm292 = vmor %vm290, %vm291
        %v293 = vsel %vm292, %v284, %v289
        %v294 = vsub.f32 %v272, %v275
        %v295 = vmul.f32 %v294, %v293
        %v296 = vld [vmem:[%s231] sm:$0x1]
        %v297 = vld [vmem:[%s240] sm:$0x1]
        %v299 = vperm.slane %v296, 0
        %v301 = vmul.f32 %v299, %v295
        %v303 = vperm.slane %v297, 0
        %v305 = vadd.f32 %v301, %v303
        %306 = vst [vmem:[%s271] sm:$0xff] %v305
        %s307 = sand.u32 %s125, 1
        %s308 = scalar_lea.sflag [#allocation4], %s307
        %s309 = sand.u32 %s125, 1
        %s310 = smul.addr %s309, 8
        %s311 = scalar_lea.vmem [#allocation8], %s310
        // Predicated region
        $region45: #{tpu_custom_call.1} parent=31 // pred_check
          %p312 = pneg %p135
        $region46: #{tpu_custom_call.1} parent=31 // pred_check_branch
          %314 = sbr.rel (%p312) target = $region48
        $region47: #{tpu_custom_call.1} parent=31 // pred_region
          %316 = vsyncadd %s308, 0
          %s317 = sadd.s32 %s28, %s27
          %s318 = smul.addr %s317, 8
          %s319 = scalar_lea.hbm %s3, %s318
          %s321 = sshll.u32 %s311, 4
          %s322 = int_to_ptr.vmem [resolvable:$true] %s321
          %s323 = sshll.u32 %s319, 4
          %s324 = int_to_ptr.hbm [resolvable:$true] %s323
          %326 = dma.vmem_to_hbm [thread:$0]  %s322, 128, %s324, %s308
        $region48: #{tpu_custom_call.1} parent=31 // pred_fallthru
          _
      $region32: #{tpu_custom_call.1} parent=5 // pred_fallthru
        _
      %p327 = scmp.le.s32.totalorder 2, %s18
      // Predicated region
      $region49: #{tpu_custom_call.1} parent=5 // pred_check
        %p328 = pneg %p327
      $region50: #{tpu_custom_call.1} parent=5 // pred_check_branch
        %330 = sbr.rel (%p328) target = $region52
      $region51: #{tpu_custom_call.1} parent=5 // pred_region
        %s331 = ssub.s32 %s18, 2
        // Predicated region
        $region53: #{tpu_custom_call.1} parent=51 // pred_check
          %p332 = pneg %p141
        $region54: #{tpu_custom_call.1} parent=51 // pred_check_branch
          %334 = sbr.rel (%p332) target = $region56
        $region55: #{tpu_custom_call.1} parent=51 // pred_region
          %s335 = sand.u32 %s126, 1
          %s336 = scalar_lea.sflag [#allocation4], %s335
          %s337 = sand.u32 %s126, 1
          %s338 = smul.addr %s337, 8
          %s339 = scalar_lea.vmem [#allocation8], %s338
          %341 = dma.done %s336, 128
        $region56: #{tpu_custom_call.1} parent=51 // pred_fallthru
          _
      $region52: #{tpu_custom_call.1} parent=5 // pred_fallthru
        _
    $region6: #{tpu_custom_call.1} parent=1 // loop_footer
      %s22 = sadd.s32 1, %s18
    $region7: #{tpu_custom_call.1} parent=1 // loop_footer_branch
      %17 = sbr.rel target = $region3
    $region8: #{tpu_custom_call.1} parent=1 // loop_exit
      _
    %342 = vsyncpa [#allocation3], 1
    %s343 = scalar_lea.sflag [#allocation3], 1
    %344 = vsyncpa %s343, 1
    %345 = vsyncpa [#allocation6], 1
    %s346 = scalar_lea.sflag [#allocation6], 1
    %347 = vsyncpa %s346, 1
    %348 = vsyncpa [#allocation4], 1
    %s349 = scalar_lea.sflag [#allocation4], 1
    %350 = vsyncpa %s349, 1

</llo_original>
